<compile_context>
chip_gen: v6e
topology: v6e:2x2x1
jax: 0.10.0
libtpu: 0.0.40
codegen_flags: <defaults>
</compile_context>

<pallas_src>
from functools import partial

import numpy as np
import jax
import jax.numpy as jnp
from jax import lax
from jax.experimental import pallas as pl
from jax.experimental.pallas import tpu as pltpu


def _round_up(x, m):
    return (x + m - 1) // m * m


def _cdiv(a, b):
    return -(-a // b)


# --------------------------------------------------------------------------
# Anchor utilities (pure numpy / JAX glue, same as the PyTorch helpers)
# --------------------------------------------------------------------------
def generate_anchor_base(base_size=16, ratios=(0.5, 1, 2), anchor_scales=(8, 16, 32)):
    anchor_base = np.zeros((len(ratios) * len(anchor_scales), 4), dtype=np.float32)
    for i, r in enumerate(ratios):
        for j, s in enumerate(anchor_scales):
            h = base_size * s * np.sqrt(r)
            w = base_size * s * np.sqrt(1.0 / r)
            idx = i * len(anchor_scales) + j
            anchor_base[idx] = [-w / 2.0, -h / 2.0, w / 2.0, h / 2.0]  # (x1, y1, x2, y2)
    return anchor_base


def enumerate_shifted_anchor(anchor_base, feat_stride, height, width):
    shift_x = np.arange(0, width * feat_stride, feat_stride, dtype=np.float32)
    shift_y = np.arange(0, height * feat_stride, feat_stride, dtype=np.float32)
    sx, sy = np.meshgrid(shift_x, shift_y)
    shift = np.stack((sx.ravel(), sy.ravel(), sx.ravel(), sy.ravel()), axis=1)
    A = anchor_base.shape[0]
    K = shift.shape[0]
    anchor = anchor_base.reshape((1, A, 4)) + shift.reshape((K, 1, 4))
    return anchor.reshape((K * A, 4)).astype(np.float32)


def loc2bbox(anchor, loc):
    src_w = anchor[:, 2] - anchor[:, 0]
    src_h = anchor[:, 3] - anchor[:, 1]
    src_cx = anchor[:, 0] + 0.5 * src_w
    src_cy = anchor[:, 1] + 0.5 * src_h
    dx, dy, dw, dh = loc[:, 0], loc[:, 1], loc[:, 2], loc[:, 3]
    cx = dx * src_w + src_cx
    cy = dy * src_h + src_cy
    w = jnp.exp(dw) * src_w
    h = jnp.exp(dh) * src_h
    return jnp.stack([cx - 0.5 * w, cy - 0.5 * h, cx + 0.5 * w, cy + 0.5 * h], axis=1)


# --------------------------------------------------------------------------
# Pallas kernel: conv1(3x3)+ReLU -> fused (loc | score | softmax-diff) head
# --------------------------------------------------------------------------
def _rpn_head_kernel(xcol_ref, w1r_ref, b1_ref, wh_ref, bh_ref, mask_ref,
                     out_ref, *, wp, tr):
    # xcol_ref : (TR + 2*Wp, K3p)  bf16 -- dx taps folded into channels, + dy halo
    # w1r_ref  : (3, K3p, Cmid_p)  bf16 -- conv weight, one slab per dy tap
    # wh_ref   : (Cmid_p, Nout)    bf16 -- fused [loc | score | fg-bg diff | 0]
    # mask_ref : (1, Nout)         f32  -- 1.0 on the fg-bg diff (prob) columns
    # out_ref  : (TR, Nout)        f32  -- lane-dense fused output tile
    #
    # 3x3 conv == 3 MXU matmuls over the dy taps (dy*Wp row offsets are
    # sublane-aligned); accumulate in values (registers / MXU result buffer),
    # no VMEM scratch round-trips.
    acc = jnp.dot(xcol_ref[0:tr, :], w1r_ref[0],
                  preferred_element_type=jnp.float32)
    acc = acc + jnp.dot(xcol_ref[wp:wp + tr, :], w1r_ref[1],
                        preferred_element_type=jnp.float32)
    acc = acc + jnp.dot(xcol_ref[2 * wp:2 * wp + tr, :], w1r_ref[2],
                        preferred_element_type=jnp.float32)
    hidden = jnp.maximum(acc + b1_ref[...], 0.0)          # bias + ReLU (f32)

    # Single fused 1x1 head matmul (lane-dense 128-wide result).
    fused = jnp.dot(hidden.astype(wh_ref.dtype), wh_ref[...],
                    preferred_element_type=jnp.float32) + bh_ref[...]

    # Per-anchor 2-class softmax == sigmoid of the fg-bg logit differences the
    # fused head already produced on the masked columns.  Exact reciprocal;
    # argument clipped so exp() never overflows on the non-prob lanes.
    z = jnp.clip(fused, -30.0, 30.0)
    probs = 1.0 / (1.0 + jnp.exp(-z))
    m = mask_ref[...]                                      # (1, Nout) broadcast
    out_ref[...] = fused * (1.0 - m) + probs * m


def _vmem_targets():
    """Per-generation VMEM budget (drives tile choice) and declared cap."""
    try:
        phys = int(pltpu.get_tpu_info().vmem_capacity_bytes)
    except Exception:
        phys = 64 << 20                            # assume the smallest (v7x)
    target = min(int(phys * 0.60), 96 << 20)       # drives the row-tile choice
    cap = min(int(phys * 0.85), 112 << 20)         # never declare more than this
    return target, cap


def _choose_row_tile(hw, wp, k3p, cmid_p, n_out, vmem_target):
    halo = 2 * wp
    # Bytes that scale with TR: double-buffered bf16 input rows + f32 output
    # rows + the f32 conv accumulator / bf16 hidden / fused-head temporaries.
    per_row = (2 * k3p * 2 + 2 * n_out * 4
               + cmid_p * 4 + cmid_p * 2 + 3 * n_out * 4)
    # TR-independent bytes: double-buffered weights/biases/mask, halo rows,
    # plus headroom for compiler internal scratch.
    fixed = (2 * (3 * k3p * cmid_p * 2 + cmid_p * 4
                  + cmid_p * n_out * 2 + 2 * n_out * 4)
             + 2 * halo * k3p * 2 + (2 << 20))
    avail = max(vmem_target - fixed, per_row * wp)
    budget_rows = max(wp, (avail // per_row) // wp * wp)
    # Prefer >= ~4 tiles so the DMA pipeline has steps to overlap and v7x's
    # second TensorCore gets spatial work even at batch 1.
    pref_rows = max(wp, _round_up(_cdiv(hw, 4), wp))
    tr = int(min(hw, budget_rows, pref_rows))
    n_tiles = _cdiv(hw, tr)
    return tr, n_tiles


def rpn_head_pallas(x_nchw, params):
    """Runs the RPN head.  x_nchw: (N, Cin, H, W) float32."""
    w1, b1, ws, bs, wl, bl = params
    n, c, h, w = x_nchw.shape
    cmid = w1.shape[3]
    n_score = ws.shape[1]            # 2 * A
    n_loc = wl.shape[1]              # 4 * A

    cmid_p = _round_up(cmid, 128)              # lane-dense hidden layer
    n_head = n_loc + 2 * n_score               # loc | score | score-diff
    n_out = _round_up(n_head, 128)             # lane-dense output slab
    wp = _round_up(w, 8)                       # sublane-aligned width
    hw = h * wp
    k3 = 3 * c
    k3p = _round_up(k3, 128)                   # lane-dense matmul K (small Cin)
    halo = 2 * wp

    vmem_target, vmem_cap = _vmem_targets()
    tr, n_tiles = _choose_row_tile(hw, wp, k3p, cmid_p, n_out, vmem_target)

    # ---- input: NCHW -> NHWC, cast to bf16 FIRST (halves wrapper HBM traffic),
    #      zero-pad for SAME conv, im2col the 3 dx taps, pad W->Wp and K->K3p.
    x = jnp.transpose(x_nchw, (0, 2, 3, 1)).astype(jnp.bfloat16)
    xpad = jnp.pad(x, ((0, 0), (1, 1), (1, 1), (0, 0)))
    xcol = jnp.concatenate([xpad[:, :, dx:dx + w, :] for dx in range(3)], axis=-1)
    xcol = jnp.pad(xcol, ((0, 0), (0, 0), (0, wp - w), (0, k3p - k3)))
    xcol = xcol.reshape(n, (h + 2) * wp, k3p)
    # Pad rows so every (overlapping) row-tile slice is in bounds, then
    # duplicate the 2*Wp conv halo per tile so a plain Blocked BlockSpec can
    # fetch each tile with one aligned DMA.
    rows_needed = n_tiles * tr + halo
    if rows_needed > (h + 2) * wp:
        xcol = jnp.pad(xcol, ((0, 0), (0, rows_needed - (h + 2) * wp), (0, 0)))
    xtiles = jnp.stack(
        [lax.slice_in_dim(xcol, t * tr, t * tr + tr + halo, axis=1)
         for t in range(n_tiles)], axis=1)               # (n, n_tiles, tr+halo, k3p)
    xtiles = xtiles.reshape(n * n_tiles, tr + halo, k3p)

    # ---- conv weight: (3,3,Cin,Cmid) HWIO -> (3, K3p, Cmid_p), bf16
    w1r = jnp.pad(w1.reshape(3, k3, cmid),
                  ((0, 0), (0, k3p - k3), (0, cmid_p - cmid))).astype(jnp.bfloat16)
    b1p = jnp.pad(b1.reshape(1, cmid), ((0, 0), (0, cmid_p - cmid))).astype(jnp.float32)

    # ---- fused head: [loc | score | (score - partner_score) | zero pad]
    pidx = np.arange(n_score)
    pidx = pidx + 1 - 2 * (pidx % 2)           # even<->odd partner within each pair
    bs2 = bs.reshape(1, -1)
    w_diff = ws - ws[:, pidx]
    b_diff = bs2 - bs2[:, pidx]
    wh = jnp.concatenate([wl, ws, w_diff], axis=1)
    bh = jnp.concatenate([bl.reshape(1, -1), bs2, b_diff], axis=1)
    wh = jnp.pad(wh, ((0, cmid_p - cmid), (0, n_out - n_head))).astype(jnp.bfloat16)
    bh = jnp.pad(bh, ((0, 0), (0, n_out - n_head))).astype(jnp.float32)

    # ---- tiny (1, Nout) lane mask selecting the prob (fg-bg diff) columns
    mask_np = np.zeros((1, n_out), dtype=np.float32)
    mask_np[0, n_loc + n_score:n_loc + 2 * n_score] = 1.0
    mask = jnp.asarray(mask_np)

    # ---- VMEM limit from the actual per-step blocks + in-kernel temporaries
    vmem_need = (2 * (tr + halo) * k3p * 2                          # input tile x2 bufs
                 + 2 * (3 * k3p * cmid_p * 2 + cmid_p * 4
                        + cmid_p * n_out * 2 + 2 * n_out * 4)       # weights/bias/mask x2
                 + 2 * tr * n_out * 4                               # output tile x2 bufs
                 + tr * (cmid_p * 4 + cmid_p * 2 + 3 * n_out * 4))  # acc/hidden/fused temps
    vmem_limit = int(min(max(vmem_need + (4 << 20), 8 << 20), vmem_cap))

    kernel = partial(_rpn_head_kernel, wp=wp, tr=tr)
    grid_spec = pltpu.PrefetchScalarGridSpec(
        num_scalar_prefetch=0,
        grid=(n, n_tiles),
        in_specs=[
            pl.BlockSpec((None, tr + halo, k3p),
                         lambda i, t: (i * n_tiles + t, 0, 0)),
            # Weight/bias/mask index maps are constant across the grid, so the
            # pipeline fetches them once and skips redundant DMAs.
            # TODO(synk): single-buffer them via pipeline_mode=pl.Buffered(1)
            # once that is reliably honored by the top-level pallas_call pipeline.
            pl.BlockSpec((3, k3p, cmid_p), lambda i, t: (0, 0, 0)),
            pl.BlockSpec((1, cmid_p), lambda i, t: (0, 0)),
            pl.BlockSpec((cmid_p, n_out), lambda i, t: (0, 0)),
            pl.BlockSpec((1, n_out), lambda i, t: (0, 0)),
            pl.BlockSpec((1, n_out), lambda i, t: (0, 0)),
        ],
        out_specs=pl.BlockSpec((None, tr, n_out), lambda i, t: (i, t, 0)),
    )
    out = pl.pallas_call(
        kernel,
        out_shape=jax.ShapeDtypeStruct((n, n_tiles * tr, n_out), jnp.float32),
        grid_spec=grid_spec,
        compiler_params=pltpu.CompilerParams(
            dimension_semantics=("parallel", "parallel"),
            vmem_limit_bytes=vmem_limit,
        ),
    )(xtiles, w1r, b1p, wh, bh, mask)

    # ---- drop padded rows/width, split the fused slab into (locs, scores, probs)
    out = out[:, :hw, :].reshape(n, h, wp, n_out)[:, :, :w, :].reshape(n, h * w, n_out)
    locs = out[..., :n_loc]
    scores = out[..., n_loc:n_loc + n_score]
    probs = out[..., n_loc + n_score:n_loc + 2 * n_score]
    return locs, scores, probs


# --------------------------------------------------------------------------
# Full RegionProposalNetwork.forward equivalent
# --------------------------------------------------------------------------
def region_proposal_network_forward(x_nchw, img_size, params, anchor_base,
                                    feat_stride=16, scale=1.0):
    n, _, h, w = x_nchw.shape
    A = anchor_base.shape[0]

    locs_c, scores_c, probs_c = rpn_head_pallas(x_nchw, params)
    rpn_locs = locs_c.reshape(n, h * w * A, 4)        # == permute(0,2,3,1).view(n,-1,4)
    rpn_scores = scores_c.reshape(n, h * w * A, 2)
    rpn_fg_scores = probs_c.reshape(n, h * w * A, 2)[:, :, 1]  # would drive the (skipped) NMS

    anchor = enumerate_shifted_anchor(anchor_base, feat_stride, h, w)
    anchor_j = jnp.asarray(anchor)

    rois_list, idx_list = [], []
    for i in range(n):
        roi = loc2bbox(anchor_j, rpn_locs[i])
        roi = roi.at[:, 0::2].set(jnp.clip(roi[:, 0::2], 0.0, float(img_size[1])))
        roi = roi.at[:, 1::2].set(jnp.clip(roi[:, 1::2], 0.0, float(img_size[0])))
        # TODO(synk): ProposalCreator's min-size mask, score argsort/top-k and NMS are
        # dynamic-shape ops with no clean Pallas/TPU equivalent; returning all clamped
        # decoded boxes instead of the NMS-selected subset.
        rois_list.append(roi)
        idx_list.append(jnp.full((roi.shape[0],), float(i), dtype=jnp.float32))

    rois = jnp.concatenate(rois_list, axis=0)
    roi_indices = jnp.concatenate(idx_list, axis=0)
    return rpn_locs, rpn_scores, rois, roi_indices, anchor


# --------------------------------------------------------------------------
# Pure-JAX f32 reference for the head (used only to verify the kernel)
# --------------------------------------------------------------------------
def rpn_head_reference(x_nchw, params):
    w1, b1, ws, bs, wl, bl = params
    x = jnp.transpose(x_nchw, (0, 2, 3, 1))
    hmid = lax.conv_general_dilated(x, w1, (1, 1), "SAME",
                                    dimension_numbers=("NHWC", "HWIO", "NHWC"))
    hmid = jnp.maximum(hmid + b1.reshape(1, 1, 1, -1), 0.0)
    locs = jnp.einsum("nhwc,ck->nhwk", hmid, wl) + bl.reshape(1, 1, 1, -1)
    scores = jnp.einsum("nhwc,ck->nhwk", hmid, ws) + bs.reshape(1, 1, 1, -1)
    n, H, W, _ = locs.shape
    locs = locs.reshape(n, H * W, -1)
    scores = scores.reshape(n, H * W, -1)
    probs = jax.nn.softmax(scores.reshape(n, H * W, -1, 2), axis=-1).reshape(n, H * W, -1)
    return locs, scores, probs


if __name__ == "__main__":
    # Small, module-consistent shapes: batch=2, in_channels=16, mid_channels=32,
    # 16x16 feature map (forces the multi-tile + halo path: Wp=16, hw=256,
    # TR=64 -> 4 row tiles), feat_stride=16 -> img_size=(256,256), 9 anchors.
    key = jax.random.PRNGKey(0)
    N, CIN, CMID, H, W = 2, 16, 32, 16, 16
    FEAT_STRIDE = 16
    IMG_SIZE = (H * FEAT_STRIDE, W * FEAT_STRIDE)

    anchor_base = generate_anchor_base()          # (9, 4)
    A = anchor_base.shape[0]

    kx, k1, k2, k3 = jax.random.split(key, 4)
    # Feature-map scale bumped (x4) so bf16 matmul noise stays well below signal.
    x = 4.0 * jax.random.normal(kx, (N, CIN, H, W), dtype=jnp.float32)

    # normal_init(m, 0, 0.01): weights ~ N(0, 0.01), biases = 0  (deterministic PRNG)
    w1 = 0.01 * jax.random.normal(k1, (3, 3, CIN, CMID), dtype=jnp.float32)   # HWIO
    b1 = jnp.zeros((1, CMID), dtype=jnp.float32)
    ws = 0.01 * jax.random.normal(k2, (CMID, A * 2), dtype=jnp.float32)
    bs = jnp.zeros((1, A * 2), dtype=jnp.float32)
    wl = 0.01 * jax.random.normal(k3, (CMID, A * 4), dtype=jnp.float32)
    bl = jnp.zeros((1, A * 4), dtype=jnp.float32)
    params = (w1, b1, ws, bs, wl, bl)

    rpn_locs, rpn_scores, rois, roi_indices, anchor = jax.block_until_ready(
        region_proposal_network_forward(x, IMG_SIZE, params, anchor_base,
                                        feat_stride=FEAT_STRIDE, scale=1.0))

    # Verify the Pallas hot path against a pure-JAX f32 reference (kernel uses
    # bf16 matmul inputs -> looser tolerances than a pure-f32 comparison).
    locs_k, scores_k, probs_k = jax.block_until_ready(rpn_head_pallas(x, params))
    locs_r, scores_r, probs_r = rpn_head_reference(x, params)
    np.testing.assert_allclose(np.asarray(locs_k), np.asarray(locs_r), rtol=5e-2, atol=1e-3)
    np.testing.assert_allclose(np.asarray(scores_k), np.asarray(scores_r), rtol=5e-2, atol=1e-3)
    np.testing.assert_allclose(np.asarray(probs_k), np.asarray(probs_r), rtol=2e-2, atol=5e-3)

    assert rpn_locs.shape == (N, H * W * A, 4)
    assert rpn_scores.shape == (N, H * W * A, 2)
    assert rois.shape == (N * H * W * A, 4)
    assert roi_indices.shape == (N * H * W * A,)
    assert anchor.shape == (H * W * A, 4)

    print("KERNEL_OK")
</pallas_src>

<mosaic_0001>
module attributes {stable_mosaic.version = 11 : i64} {
  func.func @_rpn_head_kernel(%arg0: i32, %arg1: i32, %arg2: memref<1x96x128xbf16, #tpu.memory_space<vmem>>, %arg3: memref<3x128x128xbf16, #tpu.memory_space<vmem>>, %arg4: memref<1x128xf32, #tpu.memory_space<vmem>>, %arg5: memref<128x128xbf16, #tpu.memory_space<vmem>>, %arg6: memref<1x128xf32, #tpu.memory_space<vmem>>, %arg7: memref<1x128xf32, #tpu.memory_space<vmem>>, %arg8: memref<1x64x128xf32, #tpu.memory_space<vmem>>) attributes {dimension_semantics = [#tpu.dimension_semantics<parallel>, #tpu.dimension_semantics<parallel>], iteration_bounds = array<i64: 2, 4>, scalar_prefetch = 0 : i64, scratch_operands = 0 : i64, tpu.core_type = #tpu.core_type<tc>, window_params = [{transform_indices = @transform_0, window_bounds = array<i64: 1, 96, 128>}, {pipeline_mode = #tpu.pipeline_mode<synchronous>, transform_indices = @transform_1, window_bounds = array<i64: 3, 128, 128>}, {pipeline_mode = #tpu.pipeline_mode<synchronous>, transform_indices = @transform_2, window_bounds = array<i64: 1, 128>}, {pipeline_mode = #tpu.pipeline_mode<synchronous>, transform_indices = @transform_3, window_bounds = array<i64: 128, 128>}, {pipeline_mode = #tpu.pipeline_mode<synchronous>, transform_indices = @transform_4, window_bounds = array<i64: 1, 128>}, {pipeline_mode = #tpu.pipeline_mode<synchronous>, transform_indices = @transform_5, window_bounds = array<i64: 1, 128>}, {transform_indices = @transform_6, window_bounds = array<i64: 1, 64, 128>}]} {
    %c0 = arith.constant 0 : index
    %c0_0 = arith.constant 0 : index
    %c0_1 = arith.constant 0 : index
    %0 = vector.load %arg2[%c0, %c0_0, %c0_1] : memref<1x96x128xbf16, #tpu.memory_space<vmem>>, vector<1x64x128xbf16>
    %1 = vector.shape_cast %0 : vector<1x64x128xbf16> to vector<64x128xbf16>
    %c0_2 = arith.constant 0 : index
    %c0_3 = arith.constant 0 : index
    %c0_4 = arith.constant 0 : index
    %2 = vector.load %arg3[%c0_2, %c0_3, %c0_4] : memref<3x128x128xbf16, #tpu.memory_space<vmem>>, vector<1x128x128xbf16>
    %3 = vector.shape_cast %2 : vector<1x128x128xbf16> to vector<128x128xbf16>
    %cst = arith.constant dense<0.000000e+00> : vector<64x128xf32>
    %4 = tpu.matmul %1, %3, %cst {dimension_numbers = #tpu.dot_dimension_numbers<[1], [0], [0], [1], [0, 0, 1, 1], [], []>} : vector<64x128xbf16>, vector<128x128xbf16>, vector<64x128xf32> -> vector<64x128xf32>
    %c0_5 = arith.constant 0 : index
    %c16 = arith.constant 16 : index
    %c0_6 = arith.constant 0 : index
    %5 = vector.load %arg2[%c0_5, %c16, %c0_6] : memref<1x96x128xbf16, #tpu.memory_space<vmem>>, vector<1x64x128xbf16>
    %6 = vector.shape_cast %5 : vector<1x64x128xbf16> to vector<64x128xbf16>
    %c1 = arith.constant 1 : index
    %c0_7 = arith.constant 0 : index
    %c0_8 = arith.constant 0 : index
    %7 = vector.load %arg3[%c1, %c0_7, %c0_8] : memref<3x128x128xbf16, #tpu.memory_space<vmem>>, vector<1x128x128xbf16>
    %8 = vector.shape_cast %7 : vector<1x128x128xbf16> to vector<128x128xbf16>
    %cst_9 = arith.constant dense<0.000000e+00> : vector<64x128xf32>
    %9 = tpu.matmul %6, %8, %cst_9 {dimension_numbers = #tpu.dot_dimension_numbers<[1], [0], [0], [1], [0, 0, 1, 1], [], []>} : vector<64x128xbf16>, vector<128x128xbf16>, vector<64x128xf32> -> vector<64x128xf32>
    %10 = arith.addf %4, %9 : vector<64x128xf32>
    %c0_10 = arith.constant 0 : index
    %c32 = arith.constant 32 : index
    %c0_11 = arith.constant 0 : index
    %11 = vector.load %arg2[%c0_10, %c32, %c0_11] : memref<1x96x128xbf16, #tpu.memory_space<vmem>>, vector<1x64x128xbf16>
    %12 = vector.shape_cast %11 : vector<1x64x128xbf16> to vector<64x128xbf16>
    %c2 = arith.constant 2 : index
    %c0_12 = arith.constant 0 : index
    %c0_13 = arith.constant 0 : index
    %13 = vector.load %arg3[%c2, %c0_12, %c0_13] : memref<3x128x128xbf16, #tpu.memory_space<vmem>>, vector<1x128x128xbf16>
    %14 = vector.shape_cast %13 : vector<1x128x128xbf16> to vector<128x128xbf16>
    %cst_14 = arith.constant dense<0.000000e+00> : vector<64x128xf32>
    %15 = tpu.matmul %12, %14, %cst_14 {dimension_numbers = #tpu.dot_dimension_numbers<[1], [0], [0], [1], [0, 0, 1, 1], [], []>} : vector<64x128xbf16>, vector<128x128xbf16>, vector<64x128xf32> -> vector<64x128xf32>
    %16 = arith.addf %10, %15 : vector<64x128xf32>
    %c0_15 = arith.constant 0 : index
    %c0_16 = arith.constant 0 : index
    %17 = vector.load %arg4[%c0_15, %c0_16] : memref<1x128xf32, #tpu.memory_space<vmem>>, vector<1x128xf32>
    %18 = vector.broadcast %17 : vector<1x128xf32> to vector<64x128xf32>
    %19 = arith.addf %16, %18 : vector<64x128xf32>
    %cst_17 = arith.constant 0.000000e+00 : f32
    %20 = vector.broadcast %cst_17 : f32 to vector<64x128xf32>
    %21 = arith.maximumf %19, %20 : vector<64x128xf32>
    %22 = arith.truncf %21 : vector<64x128xf32> to vector<64x128xbf16>
    %c0_18 = arith.constant 0 : index
    %c0_19 = arith.constant 0 : index
    %23 = vector.load %arg5[%c0_18, %c0_19] : memref<128x128xbf16, #tpu.memory_space<vmem>>, vector<128x128xbf16>
    %cst_20 = arith.constant dense<0.000000e+00> : vector<64x128xf32>
    %24 = tpu.matmul %22, %23, %cst_20 {dimension_numbers = #tpu.dot_dimension_numbers<[1], [0], [0], [1], [0, 0, 1, 1], [], []>} : vector<64x128xbf16>, vector<128x128xbf16>, vector<64x128xf32> -> vector<64x128xf32>
    %c0_21 = arith.constant 0 : index
    %c0_22 = arith.constant 0 : index
    %25 = vector.load %arg6[%c0_21, %c0_22] : memref<1x128xf32, #tpu.memory_space<vmem>>, vector<1x128xf32>
    %26 = vector.broadcast %25 : vector<1x128xf32> to vector<64x128xf32>
    %27 = arith.addf %24, %26 : vector<64x128xf32>
    %cst_23 = arith.constant -3.000000e+01 : f32
    %cst_24 = arith.constant 3.000000e+01 : f32
    %28 = vector.broadcast %cst_23 : f32 to vector<64x128xf32>
    %29 = arith.maximumf %28, %27 : vector<64x128xf32>
    %30 = vector.broadcast %cst_24 : f32 to vector<64x128xf32>
    %31 = arith.minimumf %30, %29 : vector<64x128xf32>
    %cst_25 = arith.constant 0.000000e+00 : f32
    %32 = vector.broadcast %cst_25 : f32 to vector<64x128xf32>
    %33 = arith.subf %32, %31 : vector<64x128xf32>
    %34 = math.exp %33 : vector<64x128xf32>
    %cst_26 = arith.constant 1.000000e+00 : f32
    %35 = vector.broadcast %cst_26 : f32 to vector<64x128xf32>
    %36 = arith.addf %35, %34 : vector<64x128xf32>
    %cst_27 = arith.constant 1.000000e+00 : f32
    %37 = vector.broadcast %cst_27 : f32 to vector<64x128xf32>
    %38 = arith.divf %37, %36 : vector<64x128xf32>
    %c0_28 = arith.constant 0 : index
    %c0_29 = arith.constant 0 : index
    %39 = vector.load %arg7[%c0_28, %c0_29] : memref<1x128xf32, #tpu.memory_space<vmem>>, vector<1x128xf32>
    %cst_30 = arith.constant 1.000000e+00 : f32
    %40 = vector.broadcast %cst_30 : f32 to vector<1x128xf32>
    %41 = arith.subf %40, %39 : vector<1x128xf32>
    %42 = vector.broadcast %41 : vector<1x128xf32> to vector<64x128xf32>
    %43 = arith.mulf %27, %42 : vector<64x128xf32>
    %44 = vector.broadcast %39 : vector<1x128xf32> to vector<64x128xf32>
    %45 = arith.mulf %38, %44 : vector<64x128xf32>
    %46 = arith.addf %43, %45 : vector<64x128xf32>
    %c0_31 = arith.constant 0 : index
    %c0_32 = arith.constant 0 : index
    %c0_33 = arith.constant 0 : index
    %47 = vector.load %arg8[%c0_31, %c0_32, %c0_33] : memref<1x64x128xf32, #tpu.memory_space<vmem>>, vector<1x64x128xf32>
    %48 = vector.shape_cast %47 : vector<1x64x128xf32> to vector<64x128xf32>
    %49 = vector.shape_cast %46 : vector<64x128xf32> to vector<1x64x128xf32>
    tpu.vector_store %arg8[%c0_31, %c0_32, %c0_33], %49 {strides = array<i32>} : memref<1x64x128xf32, #tpu.memory_space<vmem>>, vector<1x64x128xf32>,
    return
  }
  func.func @transform_0(%arg0: i32, %arg1: i32) -> (i32, i32, i32) {
    %c4_i32 = arith.constant 4 : i32
    %0 = arith.muli %arg0, %c4_i32 : i32
    %1 = arith.addi %0, %arg1 : i32
    %c0_i32 = arith.constant 0 : i32
    %c0_i32_0 = arith.constant 0 : i32
    %c0_i32_1 = arith.constant 0 : i32
    return %1, %c0_i32, %c0_i32_0 : i32, i32, i32
  }
  func.func @transform_1(%arg0: i32, %arg1: i32) -> (i32, i32, i32) {
    %c0_i32 = arith.constant 0 : i32
    %c0_i32_0 = arith.constant 0 : i32
    %c0_i32_1 = arith.constant 0 : i32
    %c0_i32_2 = arith.constant 0 : i32
    return %c0_i32, %c0_i32_0, %c0_i32_1 : i32, i32, i32
  }
  func.func @transform_2(%arg0: i32, %arg1: i32) -> (i32, i32) {
    %c0_i32 = arith.constant 0 : i32
    %c0_i32_0 = arith.constant 0 : i32
    %c0_i32_1 = arith.constant 0 : i32
    return %c0_i32, %c0_i32_0 : i32, i32
  }
  func.func @transform_3(%arg0: i32, %arg1: i32) -> (i32, i32) {
    %c0_i32 = arith.constant 0 : i32
    %c0_i32_0 = arith.constant 0 : i32
    %c0_i32_1 = arith.constant 0 : i32
    return %c0_i32, %c0_i32_0 : i32, i32
  }
  func.func @transform_4(%arg0: i32, %arg1: i32) -> (i32, i32) {
    %c0_i32 = arith.constant 0 : i32
    %c0_i32_0 = arith.constant 0 : i32
    %c0_i32_1 = arith.constant 0 : i32
    return %c0_i32, %c0_i32_0 : i32, i32
  }
  func.func @transform_5(%arg0: i32, %arg1: i32) -> (i32, i32) {
    %c0_i32 = arith.constant 0 : i32
    %c0_i32_0 = arith.constant 0 : i32
    %c0_i32_1 = arith.constant 0 : i32
    return %c0_i32, %c0_i32_0 : i32, i32
  }
  func.func @transform_6(%arg0: i32, %arg1: i32) -> (i32, i32, i32) {
    %c0_i32 = arith.constant 0 : i32
    %c0_i32_0 = arith.constant 0 : i32
    return %arg0, %arg1, %c0_i32 : i32, i32, i32
  }
}

</mosaic_0001>

<llo_original>
// kernel: tpu_custom_call.1
$region0: #{tpu_custom_call.1}
  #allocation0 [shape = 'u32[]', space=smem, size = 0x4, offset = 0x4, fixed_abs, tag = 'smem constant byte address 0x4 - core index']
  #allocation1 [shape = 'u32[144,128]{1,0:T(1,128)}', space=vmem, size = 0x12000, scoped, tag = 'internal scratch']
  %s0 = inlined_call_operand.hbm [shape: bf16[8,96,128], index: 0, kind: input, shape index: {}]
  %s1 = inlined_call_operand.hbm [shape: bf16[3,128,128], index: 1, kind: input, shape index: {}]
  %s2 = inlined_call_operand.vmem [shape: f32[1,128], index: 2, kind: input, shape index: {}]
  %s3 = inlined_call_operand.hbm [shape: bf16[128,128], index: 3, kind: input, shape index: {}]
  %s4 = inlined_call_operand.vmem [shape: f32[1,128], index: 4, kind: input, shape index: {}]
  %s5 = inlined_call_operand.vmem [shape: f32[1,128], index: 5, kind: input, shape index: {}]
  %s6 = inlined_call_operand.hbm [shape: f32[2,256,128], index: 6, kind: output, shape index: {}]
  %s7 = sld [smem:[#allocation0]]
  $region69: #{tpu_custom_call.1} parent=0
    _
  %s9 = ssub.s32 1, %s7
  %s10 = scalar_select 0, %s9, %s7
  $region1: #{tpu_custom_call.1} parent=0
    #allocation2 [shape = 'u8[49152]{0}', space=vmem, size = 0xc000, scoped, tag = 'input window, operand 0']
    #allocation3 [shape = 's32[2]{0}', space=sflag, size = 0x8, scoped, tag = 'scoped memory for tpu_custom_call.1']
    #allocation4 [shape = 's32[2]{0}', space=sflag, size = 0x8, scoped, tag = 'scoped memory for tpu_custom_call.1']
    #allocation5 [shape = 'u8[98304]{0}', space=vmem, size = 0x18000, scoped, tag = 'input window, operand 1, single buffered']
    #allocation6 [shape = 's32[1]{0}', space=sflag, size = 0x4, scoped, tag = 'scoped memory for tpu_custom_call.1']
    #allocation7 [shape = 'u8[32768]{0}', space=vmem, size = 0x8000, scoped, tag = 'input window, operand 3, single buffered']
    #allocation8 [shape = 'u8[65536]{0}', space=vmem, size = 0x10000, scoped, tag = 'output window, operand 0']
    %11 = vsyncpa [#allocation3], 0
    %s12 = scalar_lea.sflag [#allocation3], 1
    %13 = vsyncpa %s12, 0
    %14 = vsyncpa [#allocation6], 0
    %15 = vsyncpa [#allocation4], 0
    %s16 = scalar_lea.sflag [#allocation4], 1
    %17 = vsyncpa %s16, 0
    loop: start=0, step=1, limit=10
    $region2: #{tpu_custom_call.1} parent=1 // loop_pre_header
      _
    $region3: #{tpu_custom_call.1} parent=1 // loop_header
      %s19 = sphi 0, %s23
      %p20 = scmp.ge.s32.totalorder %s19, 10
      %s26 = sphi 0, %s38
      %s27 = sphi 0, %s34
      %s28 = sphi 0, %s26
      %s29 = sphi 0, %s27
      %s30 = sphi 0, %s28
      %s31 = sphi 0, %s29
      %s45 = sphi 0, %s47
      %s48 = sphi 0, %s45
      %s49 = sphi 0, %s48
      %s65 = sphi 0, %s49
      %s69 = sphi 0, %s69
      %s71 = sphi 0, %s69
      %s72 = sphi 0, %s71
      %s86 = sphi 0, %s72
      %s90 = sphi 0, %s90
      %s92 = sphi 0, %s90
      %s93 = sphi 0, %s92
      %s107 = sphi 0, %s93
      %s111 = sphi 0, %s111
      %s113 = sphi 0, %s111
      %s114 = sphi 0, %s113
      %s128 = sphi 0, %s114
      %s132 = sphi 0, %s132
      %s134 = sphi 0, %s132
      %s135 = sphi 0, %s134
      %s149 = sphi 0, %s135
      %s153 = sphi 0, %s153
      %s155 = sphi 0, %s153
      %s156 = sphi 0, %s155
      %s170 = sphi 0, %s156
      %s178 = sphi 0, %s180
      %s181 = sphi 0, %s178
      %s182 = sphi 0, %s181
      %s198 = sphi 0, %s182
    $region4: #{tpu_custom_call.1} parent=1 // loop_header_branch
      %22 = sbr.rel (%p20) target = $region8
    $region5: #{tpu_custom_call.1} parent=1 // loop_body
      %s24 = ssub.s32 %s19, 1
      %s25 = ssub.s32 %s19, 2
      %s32 = sadd.s32 1, %s27
      %p33 = scmp.ge.s32.totalorder %s32, 4
      %s34 = scalar_select %p33, 0, %s32
      %s35 = sadd.s32 1, %s26
      %s36 = scalar_select %p33, %s35, %s26
      %p37 = scmp.ge.s32.totalorder %s36, 2
      %s38 = scalar_select %p37, 0, %s36
      %s39 = smul.u32 %s26, 4
      %s40 = sadd.s32 %s39, %s27
      %s41 = smul.u32 %s38, 4
      %s42 = sadd.s32 %s41, %s34
      %s43 = ssub.s32 %s40, %s42
      %p44 = scmp.eq.s32.totalorder %s43, 0
      %s46 = sadd.s32 %s45, 1
      %s47 = scalar_select %p44, %s45, %s46
      %p50 = pneg %p44
      %p51 = scmp.eq.s32.totalorder %s19, 7
      %p52 = por %p50, %p51
      %p53 = scmp.ne.s32.totalorder %s45, %s48
      %p54 = scmp.eq.s32.totalorder %s19, 0
      %p55 = por %p53, %p54
      %p56 = scmp.ne.s32.totalorder %s45, %s48
      %p57 = scmp.eq.s32.totalorder %s24, 7
      %p58 = por %p56, %p57
      %p59 = scmp.ne.s32.totalorder %s48, %s49
      %p60 = scmp.eq.s32.totalorder %s24, 0
      %p61 = por %p59, %p60
      %p62 = scmp.ne.s32.totalorder %s48, %s49
      %p63 = scmp.eq.s32.totalorder %s25, 7
      %p64 = por %p62, %p63
      %p66 = scmp.ne.s32.totalorder %s49, %s65
      %p67 = scmp.eq.s32.totalorder %s25, 0
      %p68 = por %p66, %p67
      %s70 = sadd.s32 %s69, 1
      %p73 = scmp.eq.s32.totalorder %s19, 7
      %p74 = scmp.ne.s32.totalorder %s69, %s71
      %p75 = scmp.eq.s32.totalorder %s19, 0
      %p76 = por %p74, %p75
      %p77 = scmp.ne.s32.totalorder %s69, %s71
      %p78 = scmp.eq.s32.totalorder %s24, 7
      %p79 = por %p77, %p78
      %p80 = scmp.ne.s32.totalorder %s71, %s72
      %p81 = scmp.eq.s32.totalorder %s24, 0
      %p82 = por %p80, %p81
      %p83 = scmp.ne.s32.totalorder %s71, %s72
      %p84 = scmp.eq.s32.totalorder %s25, 7
      %p85 = por %p83, %p84
      %p87 = scmp.ne.s32.totalorder %s72, %s86
      %p88 = scmp.eq.s32.totalorder %s25, 0
      %p89 = por %p87, %p88
      %s91 = sadd.s32 %s90, 1
      %p94 = scmp.eq.s32.totalorder %s19, 7
      %p95 = scmp.ne.s32.totalorder %s90, %s92
      %p96 = scmp.eq.s32.totalorder %s19, 0
      %p97 = por %p95, %p96
      %p98 = scmp.ne.s32.totalorder %s90, %s92
      %p99 = scmp.eq.s32.totalorder %s24, 7
      %p100 = por %p98, %p99
      %p101 = scmp.ne.s32.totalorder %s92, %s93
      %p102 = scmp.eq.s32.totalorder %s24, 0
      %p103 = por %p101, %p102
      %p104 = scmp.ne.s32.totalorder %s92, %s93
      %p105 = scmp.eq.s32.totalorder %s25, 7
      %p106 = por %p104, %p105
      %p108 = scmp.ne.s32.totalorder %s93, %s107
      %p109 = scmp.eq.s32.totalorder %s25, 0
      %p110 = por %p108, %p109
      %s112 = sadd.s32 %s111, 1
      %p115 = scmp.eq.s32.totalorder %s19, 7
      %p116 = scmp.ne.s32.totalorder %s111, %s113
      %p117 = scmp.eq.s32.totalorder %s19, 0
      %p118 = por %p116, %p117
      %p119 = scmp.ne.s32.totalorder %s111, %s113
      %p120 = scmp.eq.s32.totalorder %s24, 7
      %p121 = por %p119, %p120
      %p122 = scmp.ne.s32.totalorder %s113, %s114
      %p123 = scmp.eq.s32.totalorder %s24, 0
      %p124 = por %p122, %p123
      %p125 = scmp.ne.s32.totalorder %s113, %s114
      %p126 = scmp.eq.s32.totalorder %s25, 7
      %p127 = por %p125, %p126
      %p129 = scmp.ne.s32.totalorder %s114, %s128
      %p130 = scmp.eq.s32.totalorder %s25, 0
      %p131 = por %p129, %p130
      %s133 = sadd.s32 %s132, 1
      %p136 = scmp.eq.s32.totalorder %s19, 7
      %p137 = scmp.ne.s32.totalorder %s132, %s134
      %p138 = scmp.eq.s32.totalorder %s19, 0
      %p139 = por %p137, %p138
      %p140 = scmp.ne.s32.totalorder %s132, %s134
      %p141 = scmp.eq.s32.totalorder %s24, 7
      %p142 = por %p140, %p141
      %p143 = scmp.ne.s32.totalorder %s134, %s135
      %p144 = scmp.eq.s32.totalorder %s24, 0
      %p145 = por %p143, %p144
      %p146 = scmp.ne.s32.totalorder %s134, %s135
      %p147 = scmp.eq.s32.totalorder %s25, 7
      %p148 = por %p146, %p147
      %p150 = scmp.ne.s32.totalorder %s135, %s149
      %p151 = scmp.eq.s32.totalorder %s25, 0
      %p152 = por %p150, %p151
      %s154 = sadd.s32 %s153, 1
      %p157 = scmp.eq.s32.totalorder %s19, 7
      %p158 = scmp.ne.s32.totalorder %s153, %s155
      %p159 = scmp.eq.s32.totalorder %s19, 0
      %p160 = por %p158, %p159
      %p161 = scmp.ne.s32.totalorder %s153, %s155
      %p162 = scmp.eq.s32.totalorder %s24, 7
      %p163 = por %p161, %p162
      %p164 = scmp.ne.s32.totalorder %s155, %s156
      %p165 = scmp.eq.s32.totalorder %s24, 0
      %p166 = por %p164, %p165
      %p167 = scmp.ne.s32.totalorder %s155, %s156
      %p168 = scmp.eq.s32.totalorder %s25, 7
      %p169 = por %p167, %p168
      %p171 = scmp.ne.s32.totalorder %s156, %s170
      %p172 = scmp.eq.s32.totalorder %s25, 0
      %p173 = por %p171, %p172
      %s174 = ssub.s32 %s26, %s38
      %s175 = ssub.s32 %s27, %s34
      %s176 = sor.u32 %s174, %s175
      %p177 = scmp.eq.s32.totalorder %s176, 0
      %s179 = sadd.s32 %s178, 1
      %s180 = scalar_select %p177, %s178, %s179
      %p183 = pneg %p177
      %p184 = scmp.eq.s32.totalorder %s19, 7
      %p185 = por %p183, %p184
      %p186 = scmp.ne.s32.totalorder %s178, %s181
      %p187 = scmp.eq.s32.totalorder %s19, 0
      %p188 = por %p186, %p187
      %p189 = scmp.ne.s32.totalorder %s178, %s181
      %p190 = scmp.eq.s32.totalorder %s24, 7
      %p191 = por %p189, %p190
      %p192 = scmp.ne.s32.totalorder %s181, %s182
      %p193 = scmp.eq.s32.totalorder %s24, 0
      %p194 = por %p192, %p193
      %p195 = scmp.ne.s32.totalorder %s181, %s182
      %p196 = scmp.eq.s32.totalorder %s25, 7
      %p197 = por %p195, %p196
      %p199 = scmp.ne.s32.totalorder %s182, %s198
      %p200 = scmp.eq.s32.totalorder %s25, 0
      %p201 = por %p199, %p200
      %p202 = scmp.le.s32.totalorder 1, %s19
      %p203 = scmp.lt.s32.totalorder %s19, 9
      %p204 = pnand %p202, %p203
      %p205 = pneg %p204
      // Predicated region
      $region9: #{tpu_custom_call.1} parent=5 // pred_check
        _
      $region10: #{tpu_custom_call.1} parent=5 // pred_check_branch
        %207 = sbr.rel (%p204) target = $region12
      $region11: #{tpu_custom_call.1} parent=5 // pred_region
        %s208 = ssub.s32 %s19, 1
        // Predicated region
        $region13: #{tpu_custom_call.1} parent=11 // pred_check
          %p209 = pneg %p82
        $region14: #{tpu_custom_call.1} parent=11 // pred_check_branch
          %211 = sbr.rel (%p209) target = $region16
        $region15: #{tpu_custom_call.1} parent=11 // pred_region
          %s213 = ssub.s32 3072, 3072
          %214 = vsyncadd [#allocation6], %s213
          %s215 = sshll.u32 [#allocation5], 4
          %s216 = int_to_ptr.vmem [resolvable:$true] %s215
          %221 = dma.hbm_to_vmem [thread:$0]  %s1, 3072, %s216, [#allocation6], 64, 64, 4
        $region16: #{tpu_custom_call.1} parent=11 // pred_fallthru
          _
        // Predicated region
        $region17: #{tpu_custom_call.1} parent=11 // pred_check
          %p222 = pneg %p103
        $region18: #{tpu_custom_call.1} parent=11 // pred_check_branch
          %224 = sbr.rel (%p222) target = $region20
        $region19: #{tpu_custom_call.1} parent=11 // pred_region
          _
        $region20: #{tpu_custom_call.1} parent=11 // pred_fallthru
          _
        // Predicated region
        $region21: #{tpu_custom_call.1} parent=11 // pred_check
          %p225 = pneg %p124
        $region22: #{tpu_custom_call.1} parent=11 // pred_check_branch
          %227 = sbr.rel (%p225) target = $region24
        $region23: #{tpu_custom_call.1} parent=11 // pred_region
          %s229 = ssub.s32 1024, 1024
          %230 = vsyncadd [#allocation6], %s229
          %s231 = sshll.u32 [#allocation7], 4
          %s232 = int_to_ptr.vmem [resolvable:$true] %s231
          %237 = dma.hbm_to_vmem [thread:$0]  %s3, 1024, %s232, [#allocation6], 64, 64, 4
        $region24: #{tpu_custom_call.1} parent=11 // pred_fallthru
          _
        // Predicated region
        $region25: #{tpu_custom_call.1} parent=11 // pred_check
          %p238 = pneg %p145
        $region26: #{tpu_custom_call.1} parent=11 // pred_check_branch
          %240 = sbr.rel (%p238) target = $region28
        $region27: #{tpu_custom_call.1} parent=11 // pred_region
          _
        $region28: #{tpu_custom_call.1} parent=11 // pred_fallthru
          _
        // Predicated region
        $region29: #{tpu_custom_call.1} parent=11 // pred_check
          %p241 = pneg %p166
        $region30: #{tpu_custom_call.1} parent=11 // pred_check_branch
          %243 = sbr.rel (%p241) target = $region32
        $region31: #{tpu_custom_call.1} parent=11 // pred_region
          _
        $region32: #{tpu_custom_call.1} parent=11 // pred_fallthru
          _
      $region12: #{tpu_custom_call.1} parent=5 // pred_fallthru
        _
      %p244 = scmp.lt.s32.totalorder %s19, 8
      // Predicated region
      $region33: #{tpu_custom_call.1} parent=5 // pred_check
        %p245 = pneg %p244
      $region34: #{tpu_custom_call.1} parent=5 // pred_check_branch
        %247 = sbr.rel (%p245) target = $region36
      $region35: #{tpu_custom_call.1} parent=5 // pred_region
        // Predicated region
        $region37: #{tpu_custom_call.1} parent=35 // pred_check
          %p248 = pneg %p55
        $region38: #{tpu_custom_call.1} parent=35 // pred_check_branch
          %250 = sbr.rel (%p248) target = $region40
        $region39: #{tpu_custom_call.1} parent=35 // pred_region
          %s251 = sand.u32 %s45, 1
          %s252 = scalar_lea.sflag [#allocation3], %s251
          %s253 = sand.u32 %s45, 1
          %s254 = smul.addr %s253, 48
          %s255 = scalar_lea.vmem [#allocation2], %s254
          %s256 = smul.u32 %s26, 4
          %s257 = sadd.s32 %s256, %s27
          %s259 = ssub.s32 768, 768
          %260 = vsyncadd %s252, %s259
          %s261 = smul.addr %s257, 12
          %s262 = smul.addr %s261, 64
          %s263 = scalar_lea.hbm %s0, %s262
          %s264 = sshll.u32 %s255, 4
          %s265 = int_to_ptr.vmem [resolvable:$true] %s264
          %270 = dma.hbm_to_vmem [thread:$0]  %s263, 768, %s265, %s252, 64, 64, 4
        $region40: #{tpu_custom_call.1} parent=35 // pred_fallthru
          _
      $region36: #{tpu_custom_call.1} parent=5 // pred_fallthru
        _
      %p271 = scmp.le.s32.totalorder 1, %s19
      %p272 = scmp.lt.s32.totalorder %s19, 9
      %p273 = pnand %p271, %p272
      %p274 = pneg %p273
      // Predicated region
      $region41: #{tpu_custom_call.1} parent=5 // pred_check
        _
      $region42: #{tpu_custom_call.1} parent=5 // pred_check_branch
        %276 = sbr.rel (%p273) target = $region44
      $region43: #{tpu_custom_call.1} parent=5 // pred_region
        %s277 = ssub.s32 %s19, 1
        %s278 = sand.u32 %s48, 1
        %s279 = scalar_lea.sflag [#allocation3], %s278
        %s280 = sand.u32 %s48, 1
        %s281 = smul.addr %s280, 48
        %s282 = scalar_lea.vmem [#allocation2], %s281
        // Predicated region
        $region45: #{tpu_custom_call.1} parent=43 // pred_check
          %p283 = pneg %p61
        $region46: #{tpu_custom_call.1} parent=43 // pred_check_branch
          %285 = sbr.rel (%p283) target = $region48
        $region47: #{tpu_custom_call.1} parent=43 // pred_region
          %286 = dma.done %s279, 768
        $region48: #{tpu_custom_call.1} parent=43 // pred_fallthru
          _
        // Predicated region
        $region49: #{tpu_custom_call.1} parent=43 // pred_check
          %p287 = pneg %p82
        $region50: #{tpu_custom_call.1} parent=43 // pred_check_branch
          %289 = sbr.rel (%p287) target = $region52
        $region51: #{tpu_custom_call.1} parent=43 // pred_region
          %290 = dma.done [#allocation6], 3072
        $region52: #{tpu_custom_call.1} parent=43 // pred_fallthru
          _
        // Predicated region
        $region53: #{tpu_custom_call.1} parent=43 // pred_check
          %p291 = pneg %p124
        $region54: #{tpu_custom_call.1} parent=43 // pred_check_branch
          %293 = sbr.rel (%p291) target = $region56
        $region55: #{tpu_custom_call.1} parent=43 // pred_region
          %294 = dma.done [#allocation6], 1024
        $region56: #{tpu_custom_call.1} parent=43 // pred_fallthru
          _
        %s295 = sand.u32 %s48, 1
        %s296 = scalar_lea.sflag [#allocation3], %s295
        %s297 = sand.u32 %s48, 1
        %s298 = smul.addr %s297, 48
        %s299 = scalar_lea.vmem [#allocation2], %s298
        %p300 = pneg %p61
        %p301 = pneg %p58
        %p302 = pneg %p82
        %p303 = pneg %p79
        %p304 = pneg %p103
        %p305 = pneg %p100
        %p306 = pneg %p124
        %p307 = pneg %p121
        %p308 = pneg %p145
        %p309 = pneg %p142
        %p310 = pneg %p166
        %p311 = pneg %p163
        %p312 = pneg %p194
        %p313 = pneg %p191
        %s314 = sand.u32 %s181, 1
        %s315 = scalar_lea.sflag [#allocation4], %s314
        %s316 = sand.u32 %s181, 1
        %s317 = smul.addr %s316, 64
        %s318 = scalar_lea.vmem [#allocation8], %s317
        %s319 = smul.u32 %s28, 4
        %s320 = sadd.s32 %s319, %s29
        %s321 = smul.u32 8, %s29
        %v323 = vld [vmem:[%s282] sm:$0xf]
        %v324 = vld [vmem:[%s282 + $0x4] sm:$0xf]
        %v325 = vld [vmem:[%s282 + $0x8] sm:$0xf]
        %v326 = vld [vmem:[%s282 + $0xc] sm:$0xf]
        %v327 = vld [vmem:[%s282 + $0x10] sm:$0xf]
        %v328 = vld [vmem:[%s282 + $0x14] sm:$0xf]
        %v329 = vld [vmem:[%s282 + $0x18] sm:$0xf]
        %v330 = vld [vmem:[%s282 + $0x1c] sm:$0xf]
        %v331 = vld [vmem:[#allocation5] sm:$0xf]
        %v332 = vld [vmem:[#allocation5 + $0x4] sm:$0xf]
        %v333 = vld [vmem:[#allocation5 + $0x8] sm:$0xf]
        %v334 = vld [vmem:[#allocation5 + $0xc] sm:$0xf]
        %v335 = vld [vmem:[#allocation5 + $0x10] sm:$0xf]
        %v336 = vld [vmem:[#allocation5 + $0x14] sm:$0xf]
        %v337 = vld [vmem:[#allocation5 + $0x18] sm:$0xf]
        %v338 = vld [vmem:[#allocation5 + $0x1c] sm:$0xf]
        %v339 = vld [vmem:[#allocation5 + $0x20] sm:$0xf]
        %v340 = vld [vmem:[#allocation5 + $0x24] sm:$0xf]
        %v341 = vld [vmem:[#allocation5 + $0x28] sm:$0xf]
        %v342 = vld [vmem:[#allocation5 + $0x2c] sm:$0xf]
        %v343 = vld [vmem:[#allocation5 + $0x30] sm:$0xf]
        %v344 = vld [vmem:[#allocation5 + $0x34] sm:$0xf]
        %v345 = vld [vmem:[#allocation5 + $0x38] sm:$0xf]
        %v346 = vld [vmem:[#allocation5 + $0x3c] sm:$0xf]
        %v347 = vld [vmem:[%s282 + $0x20] sm:$0xf]
        %v348 = vld [vmem:[%s282 + $0x24] sm:$0xf]
        %s349 = scalar_lea.vmem [#allocation5], 64
        %v350 = vld [vmem:[%s349] sm:$0xf]
        %v351 = vld [vmem:[%s349 + $0x4] sm:$0xf]
        %v352 = vld [vmem:[%s349 + $0x8] sm:$0xf]
        %v353 = vld [vmem:[%s349 + $0xc] sm:$0xf]
        %v354 = vld [vmem:[%s349 + $0x10] sm:$0xf]
        %v355 = vld [vmem:[%s349 + $0x14] sm:$0xf]
        %v356 = vld [vmem:[%s349 + $0x18] sm:$0xf]
        %v357 = vld [vmem:[%s349 + $0x1c] sm:$0xf]
        %v358 = vld [vmem:[%s349 + $0x20] sm:$0xf]
        %v359 = vld [vmem:[%s349 + $0x24] sm:$0xf]
        %v360 = vld [vmem:[%s349 + $0x28] sm:$0xf]
        %v361 = vld [vmem:[%s349 + $0x2c] sm:$0xf]
        %v362 = vld [vmem:[%s349 + $0x30] sm:$0xf]
        %v363 = vld [vmem:[%s349 + $0x34] sm:$0xf]
        %v364 = vld [vmem:[%s349 + $0x38] sm:$0xf]
        %v365 = vld [vmem:[%s349 + $0x3c] sm:$0xf]
        %v374 = vunpack.c.l.b16 %v325
        %v375 = vunpack.c.l.b16 %v326
        %v376 = vunpack.c.l.b16 %v327
        %v377 = vunpack.c.l.b16 %v328
        %v378 = vunpack.c.l.b16 %v329
        %v379 = vunpack.c.l.b16 %v330
        %v380 = vunpack.c.l.b16 %v347
        %v381 = vunpack.c.l.b16 %v348
        %v382 = vpack.c.b16 %v375, %v374
        %v383 = vpack.c.b16 %v377, %v376
        %v384 = vpack.c.b16 %v379, %v378
        %v385 = vpack.c.b16 %v381, %v380
        %v406 = vunpack.c.l.b16 %v350
        %v407 = vunpack.c.l.b16 %v351
        %v408 = vunpack.c.l.b16 %v352
        %v409 = vunpack.c.l.b16 %v353
        %v410 = vunpack.c.l.b16 %v354
        %v411 = vunpack.c.l.b16 %v355
        %v412 = vunpack.c.l.b16 %v356
        %v413 = vunpack.c.l.b16 %v357
        %v414 = vunpack.c.l.b16 %v358
        %v415 = vunpack.c.l.b16 %v359
        %v416 = vunpack.c.l.b16 %v360
        %v417 = vunpack.c.l.b16 %v361
        %v418 = vunpack.c.l.b16 %v362
        %v419 = vunpack.c.l.b16 %v363
        %v420 = vunpack.c.l.b16 %v364
        %v421 = vunpack.c.l.b16 %v365
        %v422 = vpack.c.b16 %v407, %v406
        %v423 = vpack.c.b16 %v409, %v408
        %v424 = vpack.c.b16 %v411, %v410
        %v425 = vpack.c.b16 %v413, %v412
        %v426 = vpack.c.b16 %v415, %v414
        %v427 = vpack.c.b16 %v417, %v416
        %v428 = vpack.c.b16 %v419, %v418
        %v429 = vpack.c.b16 %v421, %v420
        %438 = vmatprep.subr.bf16.mxu0 0
        %439 = vmatpush1.bf16.msra.mxu0 %v429
        %440 = vmatprep.subr.bf16.mxu0 0
        %441 = vmatpush1.bf16.msra.mxu0 %v428
        %442 = vmatprep.subr.bf16.mxu0 0
        %443 = vmatpush1.bf16.msra.mxu0 %v427
        %444 = vmatprep.subr.bf16.mxu0 0
        %445 = vmatpush1.bf16.msra.mxu0 %v426
        %446 = vmatprep.subr.bf16.mxu0 0
        %447 = vmatpush1.bf16.msra.mxu0 %v425
        %448 = vmatprep.subr.bf16.mxu0 0
        %449 = vmatpush1.bf16.msra.mxu0 %v424
        %450 = vmatprep.subr.bf16.mxu0 0
        %451 = vmatpush1.bf16.msra.mxu0 %v423
        %452 = vmatprep.subr.bf16.mxu0 0
        %453 = vmatpush1.bf16.msra.mxu0 %v422
        %454 = vmatprep.subr.bf16.mxu0 0
        %455 = vmatpush2.bf16.msra.mxu0 0
        %456 = vmatprep.subr.bf16.mxu0 0
        %457 = vmatpush2.bf16.msra.mxu0 0
        %458 = vmatprep.subr.bf16.mxu0 0
        %459 = vmatpush2.bf16.msra.mxu0 0
        %460 = vmatprep.subr.bf16.mxu0 0
        %461 = vmatpush2.bf16.msra.mxu0 0
        %462 = vmatprep.subr.bf16.mxu0 0
        %463 = vmatpush2.bf16.msra.mxu0 0
        %464 = vmatprep.subr.bf16.mxu0 0
        %465 = vmatpush2.bf16.msra.mxu0 0
        %466 = vmatprep.subr.bf16.mxu0 0
        %467 = vmatpush2.bf16.msra.mxu0 0
        %468 = vmatprep.subr.bf16.mxu0 0
        %469 = vmatpush2.bf16.msra.mxu0 0
        %470 = vmatprep.mubr.bf16.mxu0 0
        %471 = vmatmul.mubr.bf16.gmra.mxu0 %v382
        %v472 = vpop.f32.mrf.mxu0
        %v473 = vadd.f32 0.0, %v472
        %v474 = vpop.f32.mrf.mxu0
        %v475 = vpop.f32.mrf.mxu0
        %v476 = vadd.f32 0.0, %v475
        %v477 = vpop.f32.mrf.mxu0
        %478 = vmatprep.mubr.bf16.mxu0 0
        %479 = vmatmul.mubr.bf16.gmra.mxu0 %v383
        %v480 = vpop.f32.mrf.mxu0
        %v481 = vadd.f32 0.0, %v480
        %v482 = vpop.f32.mrf.mxu0
        %v483 = vpop.f32.mrf.mxu0
        %v484 = vadd.f32 0.0, %v483
        %v485 = vpop.f32.mrf.mxu0
        %486 = vmatprep.mubr.bf16.mxu0 0
        %487 = vmatmul.mubr.bf16.gmra.mxu0 %v384
        %v488 = vpop.f32.mrf.mxu0
        %v489 = vadd.f32 0.0, %v488
        %v490 = vpop.f32.mrf.mxu0
        %v491 = vpop.f32.mrf.mxu0
        %v492 = vadd.f32 0.0, %v491
        %v493 = vpop.f32.mrf.mxu0
        %494 = vmatprep.mubr.bf16.mxu0 0
        %495 = vmatmul.mubr.bf16.gmra.mxu0 %v385
        %v496 = vpop.f32.mrf.mxu0
        %v497 = vadd.f32 0.0, %v496
        %v498 = vpop.f32.mrf.mxu0
        %v499 = vpop.f32.mrf.mxu0
        %v500 = vadd.f32 0.0, %v499
        %v501 = vpop.f32.mrf.mxu0
        %502 = vdwg.mxu0
        %v505 = vunpack.c.l.b16 %v323
        %v506 = vunpack.c.l.b16 %v324
        %v507 = vpack.c.b16 %v506, %v505
        %v525 = vunpack.c.l.b16 %v331
        %v526 = vunpack.c.l.b16 %v332
        %v527 = vunpack.c.l.b16 %v333
        %v528 = vunpack.c.l.b16 %v334
        %v529 = vunpack.c.l.b16 %v335
        %v530 = vunpack.c.l.b16 %v336
        %v531 = vunpack.c.l.b16 %v337
        %v532 = vunpack.c.l.b16 %v338
        %v533 = vunpack.c.l.b16 %v339
        %v534 = vunpack.c.l.b16 %v340
        %v535 = vunpack.c.l.b16 %v341
        %v536 = vunpack.c.l.b16 %v342
        %v537 = vunpack.c.l.b16 %v343
        %v538 = vunpack.c.l.b16 %v344
        %v539 = vunpack.c.l.b16 %v345
        %v540 = vunpack.c.l.b16 %v346
        %v541 = vpack.c.b16 %v526, %v525
        %v542 = vpack.c.b16 %v528, %v527
        %v543 = vpack.c.b16 %v530, %v529
        %v544 = vpack.c.b16 %v532, %v531
        %v545 = vpack.c.b16 %v534, %v533
        %v546 = vpack.c.b16 %v536, %v535
        %v547 = vpack.c.b16 %v538, %v537
        %v548 = vpack.c.b16 %v540, %v539
        %557 = vmatprep.subr.bf16.mxu0 0
        %558 = vmatpush1.bf16.msra.mxu0 %v548
        %559 = vmatprep.subr.bf16.mxu0 0
        %560 = vmatpush1.bf16.msra.mxu0 %v547
        %561 = vmatprep.subr.bf16.mxu0 0
        %562 = vmatpush1.bf16.msra.mxu0 %v546
        %563 = vmatprep.subr.bf16.mxu0 0
        %564 = vmatpush1.bf16.msra.mxu0 %v545
        %565 = vmatprep.subr.bf16.mxu0 0
        %566 = vmatpush1.bf16.msra.mxu0 %v544
        %567 = vmatprep.subr.bf16.mxu0 0
        %568 = vmatpush1.bf16.msra.mxu0 %v543
        %569 = vmatprep.subr.bf16.mxu0 0
        %570 = vmatpush1.bf16.msra.mxu0 %v542
        %571 = vmatprep.subr.bf16.mxu0 0
        %572 = vmatpush1.bf16.msra.mxu0 %v541
        %573 = vmatprep.subr.bf16.mxu0 0
        %574 = vmatpush2.bf16.msra.mxu0 0
        %575 = vmatprep.subr.bf16.mxu0 0
        %576 = vmatpush2.bf16.msra.mxu0 0
        %577 = vmatprep.subr.bf16.mxu0 0
        %578 = vmatpush2.bf16.msra.mxu0 0
        %579 = vmatprep.subr.bf16.mxu0 0
        %580 = vmatpush2.bf16.msra.mxu0 0
        %581 = vmatprep.subr.bf16.mxu0 0
        %582 = vmatpush2.bf16.msra.mxu0 0
        %583 = vmatprep.subr.bf16.mxu0 0
        %584 = vmatpush2.bf16.msra.mxu0 0
        %585 = vmatprep.subr.bf16.mxu0 0
        %586 = vmatpush2.bf16.msra.mxu0 0
        %587 = vmatprep.subr.bf16.mxu0 0
        %588 = vmatpush2.bf16.msra.mxu0 0
        %589 = vmatprep.mubr.bf16.mxu0 0
        %590 = vmatmul.mubr.bf16.gmra.mxu0 %v507
        %v591 = vpop.f32.mrf.mxu0
        %v592 = vadd.f32 %v473, %v591
        %v593 = vpop.f32.mrf.mxu0
        %v594 = vpop.f32.mrf.mxu0
        %v595 = vadd.f32 %v476, %v594
        %v596 = vpop.f32.mrf.mxu0
        %597 = vmatprep.mubr.bf16.mxu0 0
        %598 = vmatmul.mubr.bf16.gmra.mxu0 %v382
        %v599 = vpop.f32.mrf.mxu0
        %v600 = vadd.f32 %v481, %v599
        %v601 = vpop.f32.mrf.mxu0
        %v602 = vpop.f32.mrf.mxu0
        %v603 = vadd.f32 %v484, %v602
        %v604 = vpop.f32.mrf.mxu0
        %605 = vmatprep.mubr.bf16.mxu0 0
        %606 = vmatmul.mubr.bf16.gmra.mxu0 %v383
        %v607 = vpop.f32.mrf.mxu0
        %v608 = vadd.f32 %v489, %v607
        %v609 = vpop.f32.mrf.mxu0
        %v610 = vpop.f32.mrf.mxu0
        %v611 = vadd.f32 %v492, %v610
        %v612 = vpop.f32.mrf.mxu0
        %613 = vmatprep.mubr.bf16.mxu0 0
        %614 = vmatmul.mubr.bf16.gmra.mxu0 %v384
        %v615 = vpop.f32.mrf.mxu0
        %v616 = vadd.f32 %v497, %v615
        %v617 = vpop.f32.mrf.mxu0
        %v618 = vpop.f32.mrf.mxu0
        %v619 = vadd.f32 %v500, %v618
        %v620 = vpop.f32.mrf.mxu0
        %621 = vdwg.mxu0
        %v622 = vld [vmem:[%s282 + $0x10] sm:$0xf]
        %v623 = vld [vmem:[%s282 + $0x14] sm:$0xf]
        %v624 = vld [vmem:[%s282 + $0x18] sm:$0xf]
        %v625 = vld [vmem:[%s282 + $0x1c] sm:$0xf]
        %v626 = vld [vmem:[%s282 + $0x20] sm:$0xf]
        %v627 = vld [vmem:[%s282 + $0x24] sm:$0xf]
        %v628 = vld [vmem:[%s282 + $0x28] sm:$0xf]
        %v629 = vld [vmem:[%s282 + $0x2c] sm:$0xf]
        %s630 = scalar_lea.vmem [#allocation5], 128
        %v631 = vld [vmem:[%s630] sm:$0xf]
        %v632 = vld [vmem:[%s630 + $0x4] sm:$0xf]
        %v633 = vld [vmem:[%s630 + $0x8] sm:$0xf]
        %v634 = vld [vmem:[%s630 + $0xc] sm:$0xf]
        %v635 = vld [vmem:[%s630 + $0x10] sm:$0xf]
        %v636 = vld [vmem:[%s630 + $0x14] sm:$0xf]
        %v637 = vld [vmem:[%s630 + $0x18] sm:$0xf]
        %v638 = vld [vmem:[%s630 + $0x1c] sm:$0xf]
        %v639 = vld [vmem:[%s630 + $0x20] sm:$0xf]
        %v640 = vld [vmem:[%s630 + $0x24] sm:$0xf]
        %v641 = vld [vmem:[%s630 + $0x28] sm:$0xf]
        %v642 = vld [vmem:[%s630 + $0x2c] sm:$0xf]
        %v643 = vld [vmem:[%s630 + $0x30] sm:$0xf]
        %v644 = vld [vmem:[%s630 + $0x34] sm:$0xf]
        %v645 = vld [vmem:[%s630 + $0x38] sm:$0xf]
        %v646 = vld [vmem:[%s630 + $0x3c] sm:$0xf]
        %v655 = vunpack.c.l.b16 %v622
        %v656 = vunpack.c.l.b16 %v623
        %v657 = vunpack.c.l.b16 %v624
        %v658 = vunpack.c.l.b16 %v625
        %v659 = vunpack.c.l.b16 %v626
        %v660 = vunpack.c.l.b16 %v627
        %v661 = vunpack.c.l.b16 %v628
        %v662 = vunpack.c.l.b16 %v629
        %v663 = vpack.c.b16 %v656, %v655
        %v664 = vpack.c.b16 %v658, %v657
        %v665 = vpack.c.b16 %v660, %v659
        %v666 = vpack.c.b16 %v662, %v661
        %v687 = vunpack.c.l.b16 %v631
        %v688 = vunpack.c.l.b16 %v632
        %v689 = vunpack.c.l.b16 %v633
        %v690 = vunpack.c.l.b16 %v634
        %v691 = vunpack.c.l.b16 %v635
        %v692 = vunpack.c.l.b16 %v636
        %v693 = vunpack.c.l.b16 %v637
        %v694 = vunpack.c.l.b16 %v638
        %v695 = vunpack.c.l.b16 %v639
        %v696 = vunpack.c.l.b16 %v640
        %v697 = vunpack.c.l.b16 %v641
        %v698 = vunpack.c.l.b16 %v642
        %v699 = vunpack.c.l.b16 %v643
        %v700 = vunpack.c.l.b16 %v644
        %v701 = vunpack.c.l.b16 %v645
        %v702 = vunpack.c.l.b16 %v646
        %v703 = vpack.c.b16 %v688, %v687
        %v704 = vpack.c.b16 %v690, %v689
        %v705 = vpack.c.b16 %v692, %v691
        %v706 = vpack.c.b16 %v694, %v693
        %v707 = vpack.c.b16 %v696, %v695
        %v708 = vpack.c.b16 %v698, %v697
        %v709 = vpack.c.b16 %v700, %v699
        %v710 = vpack.c.b16 %v702, %v701
        %719 = vmatprep.subr.bf16.mxu0 0
        %720 = vmatpush1.bf16.msra.mxu0 %v710
        %721 = vmatprep.subr.bf16.mxu0 0
        %722 = vmatpush1.bf16.msra.mxu0 %v709
        %723 = vmatprep.subr.bf16.mxu0 0
        %724 = vmatpush1.bf16.msra.mxu0 %v708
        %725 = vmatprep.subr.bf16.mxu0 0
        %726 = vmatpush1.bf16.msra.mxu0 %v707
        %727 = vmatprep.subr.bf16.mxu0 0
        %728 = vmatpush1.bf16.msra.mxu0 %v706
        %729 = vmatprep.subr.bf16.mxu0 0
        %730 = vmatpush1.bf16.msra.mxu0 %v705
        %731 = vmatprep.subr.bf16.mxu0 0
        %732 = vmatpush1.bf16.msra.mxu0 %v704
        %733 = vmatprep.subr.bf16.mxu0 0
        %734 = vmatpush1.bf16.msra.mxu0 %v703
        %735 = vmatprep.subr.bf16.mxu0 0
        %736 = vmatpush2.bf16.msra.mxu0 0
        %737 = vmatprep.subr.bf16.mxu0 0
        %738 = vmatpush2.bf16.msra.mxu0 0
        %739 = vmatprep.subr.bf16.mxu0 0
        %740 = vmatpush2.bf16.msra.mxu0 0
        %741 = vmatprep.subr.bf16.mxu0 0
        %742 = vmatpush2.bf16.msra.mxu0 0
        %743 = vmatprep.subr.bf16.mxu0 0
        %744 = vmatpush2.bf16.msra.mxu0 0
        %745 = vmatprep.subr.bf16.mxu0 0
        %746 = vmatpush2.bf16.msra.mxu0 0
        %747 = vmatprep.subr.bf16.mxu0 0
        %748 = vmatpush2.bf16.msra.mxu0 0
        %749 = vmatprep.subr.bf16.mxu0 0
        %750 = vmatpush2.bf16.msra.mxu0 0
        %751 = vmatprep.mubr.bf16.mxu0 0
        %752 = vmatmul.mubr.bf16.gmra.mxu0 %v663
        %v753 = vpop.f32.mrf.mxu0
        %v754 = vadd.f32 0.0, %v753
        %v755 = vpop.f32.mrf.mxu0
        %v756 = vpop.f32.mrf.mxu0
        %v757 = vadd.f32 0.0, %v756
        %v758 = vpop.f32.mrf.mxu0
        %759 = vmatprep.mubr.bf16.mxu0 0
        %760 = vmatmul.mubr.bf16.gmra.mxu0 %v664
        %v761 = vpop.f32.mrf.mxu0
        %v762 = vadd.f32 0.0, %v761
        %v763 = vpop.f32.mrf.mxu0
        %v764 = vpop.f32.mrf.mxu0
        %v765 = vadd.f32 0.0, %v764
        %v766 = vpop.f32.mrf.mxu0
        %767 = vmatprep.mubr.bf16.mxu0 0
        %768 = vmatmul.mubr.bf16.gmra.mxu0 %v665
        %v769 = vpop.f32.mrf.mxu0
        %v770 = vadd.f32 0.0, %v769
        %v771 = vpop.f32.mrf.mxu0
        %v772 = vpop.f32.mrf.mxu0
        %v773 = vadd.f32 0.0, %v772
        %v774 = vpop.f32.mrf.mxu0
        %775 = vmatprep.mubr.bf16.mxu0 0
        %776 = vmatmul.mubr.bf16.gmra.mxu0 %v666
        %v777 = vpop.f32.mrf.mxu0
        %v778 = vadd.f32 0.0, %v777
        %v779 = vpop.f32.mrf.mxu0
        %v780 = vpop.f32.mrf.mxu0
        %v781 = vadd.f32 0.0, %v780
        %v782 = vpop.f32.mrf.mxu0
        %783 = vdwg.mxu0
        %v784 = vadd.f32 %v592, %v754
        %v785 = vadd.f32 %v595, %v757
        %v786 = vadd.f32 %v600, %v762
        %v787 = vadd.f32 %v603, %v765
        %v788 = vadd.f32 %v608, %v770
        %v789 = vadd.f32 %v611, %v773
        %v790 = vadd.f32 %v616, %v778
        %v791 = vadd.f32 %v619, %v781
        %v792 = vld [vmem:[%s2] sm:$0x1]
        %v794 = vlaneseq
        %v795 = vshrl.u32 %v794, 7
        %v796 = vsub.s32 0, %v795
        %v797 = vrot.slane %v792, %v796
        %v799 = vadd.f32 %v784, %v797
        %v800 = vadd.f32 %v785, %v797
        %v801 = vadd.f32 %v786, %v797
        %v802 = vadd.f32 %v787, %v797
        %v803 = vadd.f32 %v788, %v797
        %v804 = vadd.f32 %v789, %v797
        %v805 = vadd.f32 %v790, %v797
        %v806 = vadd.f32 %v791, %v797
        %v807 = vmax.f32 %v799, 0.0
        %v808 = vmax.f32 %v800, 0.0
        %v809 = vmax.f32 %v801, 0.0
        %v810 = vmax.f32 %v802, 0.0
        %v811 = vmax.f32 %v803, 0.0
        %v812 = vmax.f32 %v804, 0.0
        %v813 = vmax.f32 %v805, 0.0
        %v814 = vmax.f32 %v806, 0.0
        %v815 = vpack.c.bf16 %v808, %v807
        %v816 = vpack.c.bf16 %v810, %v809
        %v817 = vpack.c.bf16 %v812, %v811
        %v818 = vpack.c.bf16 %v814, %v813
        %v819 = vld [vmem:[#allocation7] sm:$0xf]
        %v820 = vld [vmem:[#allocation7 + $0x4] sm:$0xf]
        %v821 = vld [vmem:[#allocation7 + $0x8] sm:$0xf]
        %v822 = vld [vmem:[#allocation7 + $0xc] sm:$0xf]
        %v823 = vld [vmem:[#allocation7 + $0x10] sm:$0xf]
        %v824 = vld [vmem:[#allocation7 + $0x14] sm:$0xf]
        %v825 = vld [vmem:[#allocation7 + $0x18] sm:$0xf]
        %v826 = vld [vmem:[#allocation7 + $0x1c] sm:$0xf]
        %v827 = vld [vmem:[#allocation7 + $0x20] sm:$0xf]
        %v828 = vld [vmem:[#allocation7 + $0x24] sm:$0xf]
        %v829 = vld [vmem:[#allocation7 + $0x28] sm:$0xf]
        %v830 = vld [vmem:[#allocation7 + $0x2c] sm:$0xf]
        %v831 = vld [vmem:[#allocation7 + $0x30] sm:$0xf]
        %v832 = vld [vmem:[#allocation7 + $0x34] sm:$0xf]
        %v833 = vld [vmem:[#allocation7 + $0x38] sm:$0xf]
        %v834 = vld [vmem:[#allocation7 + $0x3c] sm:$0xf]
        %v835 = vld [vmem:[%s4] sm:$0x1]
        %v837 = vlaneseq
        %v838 = vshrl.u32 %v837, 7
        %v839 = vsub.s32 0, %v838
        %v840 = vrot.slane %v835, %v839
        %v858 = vunpack.c.l.b16 %v819
        %v859 = vunpack.c.l.b16 %v820
        %v860 = vunpack.c.l.b16 %v821
        %v861 = vunpack.c.l.b16 %v822
        %v862 = vunpack.c.l.b16 %v823
        %v863 = vunpack.c.l.b16 %v824
        %v864 = vunpack.c.l.b16 %v825
        %v865 = vunpack.c.l.b16 %v826
        %v866 = vunpack.c.l.b16 %v827
        %v867 = vunpack.c.l.b16 %v828
        %v868 = vunpack.c.l.b16 %v829
        %v869 = vunpack.c.l.b16 %v830
        %v870 = vunpack.c.l.b16 %v831
        %v871 = vunpack.c.l.b16 %v832
        %v872 = vunpack.c.l.b16 %v833
        %v873 = vunpack.c.l.b16 %v834
        %v874 = vpack.c.b16 %v859, %v858
        %v875 = vpack.c.b16 %v861, %v860
        %v876 = vpack.c.b16 %v863, %v862
        %v877 = vpack.c.b16 %v865, %v864
        %v878 = vpack.c.b16 %v867, %v866
        %v879 = vpack.c.b16 %v869, %v868
        %v880 = vpack.c.b16 %v871, %v870
        %v881 = vpack.c.b16 %v873, %v872
        %890 = vmatprep.subr.bf16.mxu0 0
        %891 = vmatpush1.bf16.msra.mxu0 %v881
        %892 = vmatprep.subr.bf16.mxu0 0
        %893 = vmatpush1.bf16.msra.mxu0 %v880
        %894 = vmatprep.subr.bf16.mxu0 0
        %895 = vmatpush1.bf16.msra.mxu0 %v879
        %896 = vmatprep.subr.bf16.mxu0 0
        %897 = vmatpush1.bf16.msra.mxu0 %v878
        %898 = vmatprep.subr.bf16.mxu0 0
        %899 = vmatpush1.bf16.msra.mxu0 %v877
        %900 = vmatprep.subr.bf16.mxu0 0
        %901 = vmatpush1.bf16.msra.mxu0 %v876
        %902 = vmatprep.subr.bf16.mxu0 0
        %903 = vmatpush1.bf16.msra.mxu0 %v875
        %904 = vmatprep.subr.bf16.mxu0 0
        %905 = vmatpush1.bf16.msra.mxu0 %v874
        %906 = vmatprep.subr.bf16.mxu0 0
        %907 = vmatpush2.bf16.msra.mxu0 0
        %908 = vmatprep.subr.bf16.mxu0 0
        %909 = vmatpush2.bf16.msra.mxu0 0
        %910 = vmatprep.subr.bf16.mxu0 0
        %911 = vmatpush2.bf16.msra.mxu0 0
        %912 = vmatprep.subr.bf16.mxu0 0
        %913 = vmatpush2.bf16.msra.mxu0 0
        %914 = vmatprep.subr.bf16.mxu0 0
        %915 = vmatpush2.bf16.msra.mxu0 0
        %916 = vmatprep.subr.bf16.mxu0 0
        %917 = vmatpush2.bf16.msra.mxu0 0
        %918 = vmatprep.subr.bf16.mxu0 0
        %919 = vmatpush2.bf16.msra.mxu0 0
        %920 = vmatprep.subr.bf16.mxu0 0
        %921 = vmatpush2.bf16.msra.mxu0 0
        %922 = vmatprep.mubr.bf16.mxu0 0
        %923 = vmatmul.mubr.bf16.gmra.mxu0 %v815
        %v924 = vpop.f32.mrf.mxu0
        %v925 = vadd.f32 %v840, %v924
        %v926 = vpop.f32.mrf.mxu0
        %v927 = vpop.f32.mrf.mxu0
        %v928 = vadd.f32 %v840, %v927
        %v929 = vpop.f32.mrf.mxu0
        %930 = vmatprep.mubr.bf16.mxu0 0
        %931 = vmatmul.mubr.bf16.gmra.mxu0 %v816
        %v932 = vpop.f32.mrf.mxu0
        %v933 = vadd.f32 %v840, %v932
        %v934 = vpop.f32.mrf.mxu0
        %v935 = vpop.f32.mrf.mxu0
        %v936 = vadd.f32 %v840, %v935
        %v937 = vpop.f32.mrf.mxu0
        %938 = vmatprep.mubr.bf16.mxu0 0
        %939 = vmatmul.mubr.bf16.gmra.mxu0 %v817
        %v940 = vpop.f32.mrf.mxu0
        %v941 = vadd.f32 %v840, %v940
        %v942 = vpop.f32.mrf.mxu0
        %v943 = vpop.f32.mrf.mxu0
        %v944 = vadd.f32 %v840, %v943
        %v945 = vpop.f32.mrf.mxu0
        %946 = vmatprep.mubr.bf16.mxu0 0
        %947 = vmatmul.mubr.bf16.gmra.mxu0 %v818
        %v948 = vpop.f32.mrf.mxu0
        %v949 = vadd.f32 %v840, %v948
        %v950 = vpop.f32.mrf.mxu0
        %v951 = vpop.f32.mrf.mxu0
        %v952 = vadd.f32 %v840, %v951
        %v953 = vpop.f32.mrf.mxu0
        %954 = vdwg.mxu0
        %v955 = vmax.f32 %v925, -30.0
        %v956 = vmax.f32 %v928, -30.0
        %v957 = vmax.f32 %v933, -30.0
        %v958 = vmax.f32 %v936, -30.0
        %v959 = vmax.f32 %v941, -30.0
        %v960 = vmax.f32 %v944, -30.0
        %v961 = vmax.f32 %v949, -30.0
        %v962 = vmax.f32 %v952, -30.0
        %v963 = vmin.f32 %v955, 30.0
        %v964 = vmin.f32 %v956, 30.0
        %v965 = vmin.f32 %v957, 30.0
        %v966 = vmin.f32 %v958, 30.0
        %v967 = vmin.f32 %v959, 30.0
        %v968 = vmin.f32 %v960, 30.0
        %v969 = vmin.f32 %v961, 30.0
        %v970 = vmin.f32 %v962, 30.0
        %v971 = vsub.f32 0.0, %v963
        %v972 = vsub.f32 0.0, %v964
        %v973 = vsub.f32 0.0, %v965
        %v974 = vsub.f32 0.0, %v966
        %v975 = vsub.f32 0.0, %v967
        %v976 = vsub.f32 0.0, %v968
        %v977 = vsub.f32 0.0, %v969
        %v978 = vsub.f32 0.0, %v970
        %v979 = vmul.f32 %v971, 1.442695
        %v980 = vpow.pop %v979
        %v981 = vmul.f32 %v972, 1.442695
        %v982 = vpow.pop %v981
        %v983 = vmul.f32 %v973, 1.442695
        %v984 = vpow.pop %v983
        %v985 = vmul.f32 %v974, 1.442695
        %v986 = vpow.pop %v985
        %v987 = vmul.f32 %v975, 1.442695
        %v988 = vpow.pop %v987
        %v989 = vmul.f32 %v976, 1.442695
        %v990 = vpow.pop %v989
        %v991 = vmul.f32 %v977, 1.442695
        %v992 = vpow.pop %v991
        %v993 = vmul.f32 %v978, 1.442695
        %v994 = vpow.pop %v993
        %v995 = vadd.f32 %v980, 1.0
        %v996 = vadd.f32 %v982, 1.0
        %v997 = vadd.f32 %v984, 1.0
        %v998 = vadd.f32 %v986, 1.0
        %v999 = vadd.f32 %v988, 1.0
        %v1000 = vadd.f32 %v990, 1.0
        %v1001 = vadd.f32 %v992, 1.0
        %v1002 = vadd.f32 %v994, 1.0
        %v1003 = vrcp.pop %v995
        %v1004 = vmul.f32 1.0, %v1003
        %v1005 = vrcp.pop %v996
        %v1006 = vmul.f32 1.0, %v1005
        %v1007 = vrcp.pop %v997
        %v1008 = vmul.f32 1.0, %v1007
        %v1009 = vrcp.pop %v998
        %v1010 = vmul.f32 1.0, %v1009
        %v1011 = vrcp.pop %v999
        %v1012 = vmul.f32 1.0, %v1011
        %v1013 = vrcp.pop %v1000
        %v1014 = vmul.f32 1.0, %v1013
        %v1015 = vrcp.pop %v1001
        %v1016 = vmul.f32 1.0, %v1015
        %v1017 = vrcp.pop %v1002
        %v1018 = vmul.f32 1.0, %v1017
        %v1019 = vld [vmem:[%s5] sm:$0x1]
        %v1020 = vsub.f32 1.0, %v1019
        %v1022 = vlaneseq
        %v1023 = vshrl.u32 %v1022, 7
        %v1024 = vsub.s32 0, %v1023
        %v1025 = vrot.slane %v1020, %v1024
        %v1027 = vmul.f32 %v925, %v1025
        %v1028 = vmul.f32 %v928, %v1025
        %v1029 = vmul.f32 %v933, %v1025
        %v1030 = vmul.f32 %v936, %v1025
        %v1031 = vmul.f32 %v941, %v1025
        %v1032 = vmul.f32 %v944, %v1025
        %v1033 = vmul.f32 %v949, %v1025
        %v1034 = vmul.f32 %v952, %v1025
        %v1036 = vlaneseq
        %v1037 = vshrl.u32 %v1036, 7
        %v1038 = vsub.s32 0, %v1037
        %v1039 = vrot.slane %v1019, %v1038
        %v1041 = vmul.f32 %v1004, %v1039
        %v1042 = vmul.f32 %v1006, %v1039
        %v1043 = vmul.f32 %v1008, %v1039
        %v1044 = vmul.f32 %v1010, %v1039
        %v1045 = vmul.f32 %v1012, %v1039
        %v1046 = vmul.f32 %v1014, %v1039
        %v1047 = vmul.f32 %v1016, %v1039
        %v1048 = vmul.f32 %v1018, %v1039
        %v1049 = vadd.f32 %v1027, %v1041
        %v1050 = vadd.f32 %v1028, %v1042
        %v1051 = vadd.f32 %v1029, %v1043
        %v1052 = vadd.f32 %v1030, %v1044
        %v1053 = vadd.f32 %v1031, %v1045
        %v1054 = vadd.f32 %v1032, %v1046
        %v1055 = vadd.f32 %v1033, %v1047
        %v1056 = vadd.f32 %v1034, %v1048
        %1057 = vst [vmem:[%s318] sm:$0xff] %v1049
        %1058 = vst [vmem:[%s318 + $0x8] sm:$0xff] %v1050
        %1059 = vst [vmem:[%s318 + $0x10] sm:$0xff] %v1051
        %1060 = vst [vmem:[%s318 + $0x18] sm:$0xff] %v1052
        %1061 = vst [vmem:[%s318 + $0x20] sm:$0xff] %v1053
        %1062 = vst [vmem:[%s318 + $0x28] sm:$0xff] %v1054
        %1063 = vst [vmem:[%s318 + $0x30] sm:$0xff] %v1055
        %1064 = vst [vmem:[%s318 + $0x38] sm:$0xff] %v1056
        %s1065 = sand.u32 %s181, 1
        %s1066 = scalar_lea.sflag [#allocation4], %s1065
        %s1067 = sand.u32 %s181, 1
        %s1068 = smul.addr %s1067, 64
        %s1069 = scalar_lea.vmem [#allocation8], %s1068
        // Predicated region
        $region57: #{tpu_custom_call.1} parent=43 // pred_check
          %p1070 = pneg %p191
        $region58: #{tpu_custom_call.1} parent=43 // pred_check_branch
          %1072 = sbr.rel (%p1070) target = $region60
        $region59: #{tpu_custom_call.1} parent=43 // pred_region
          %s1073 = smul.u32 8, %s29
          %s1075 = ssub.s32 1024, 1024
          %1076 = vsyncadd %s1066, %s1075
          %s1077 = smul.addr %s28, 32
          %s1078 = sadd.s32 %s1073, %s1077
          %s1079 = smul.addr %s1078, 128
          %s1080 = scalar_lea.hbm %s6, %s1079
          %s1081 = sshll.u32 %s1069, 4
          %s1082 = int_to_ptr.vmem [resolvable:$true] %s1081
          %1087 = dma.vmem_to_hbm [thread:$0]  %s1082, 1024, %s1080, %s1066, 128, 128, 8
        $region60: #{tpu_custom_call.1} parent=43 // pred_fallthru
          _
      $region44: #{tpu_custom_call.1} parent=5 // pred_fallthru
        _
      %p1088 = scmp.le.s32.totalorder 2, %s19
      // Predicated region
      $region61: #{tpu_custom_call.1} parent=5 // pred_check
        %p1089 = pneg %p1088
      $region62: #{tpu_custom_call.1} parent=5 // pred_check_branch
        %1091 = sbr.rel (%p1089) target = $region64
      $region63: #{tpu_custom_call.1} parent=5 // pred_region
        %s1092 = ssub.s32 %s19, 2
        // Predicated region
        $region65: #{tpu_custom_call.1} parent=63 // pred_check
          %p1093 = pneg %p197
        $region66: #{tpu_custom_call.1} parent=63 // pred_check_branch
          %1095 = sbr.rel (%p1093) target = $region68
        $region67: #{tpu_custom_call.1} parent=63 // pred_region
          %s1096 = sand.u32 %s182, 1
          %s1097 = scalar_lea.sflag [#allocation4], %s1096
          %s1098 = sand.u32 %s182, 1
          %s1099 = smul.addr %s1098, 64
          %s1100 = scalar_lea.vmem [#allocation8], %s1099
          %1101 = dma.done %s1097, 1024
        $region68: #{tpu_custom_call.1} parent=63 // pred_fallthru
          _
      $region64: #{tpu_custom_call.1} parent=5 // pred_fallthru
        _
    $region6: #{tpu_custom_call.1} parent=1 // loop_footer
      %s23 = sadd.s32 1, %s19
    $region7: #{tpu_custom_call.1} parent=1 // loop_footer_branch
      %18 = sbr.rel target = $region3
    $region8: #{tpu_custom_call.1} parent=1 // loop_exit
      _
    %1102 = vsyncpa [#allocation3], 1
    %s1103 = scalar_lea.sflag [#allocation3], 1
    %1104 = vsyncpa %s1103, 1
    %1105 = vsyncpa [#allocation6], 1
    %1106 = vsyncpa [#allocation4], 1
    %s1107 = scalar_lea.sflag [#allocation4], 1
    %1108 = vsyncpa %s1107, 1

</llo_original>
